<compile_context>
chip_gen: v7x
topology: tpu7x:2x2x1
jax: 0.10.0
libtpu: 0.0.40
codegen_flags: <defaults>
</compile_context>

<pallas_src>
import functools

import jax
import jax.numpy as jnp
from jax.experimental import pallas as pl
from jax.experimental.pallas import tpu as pltpu

SELU_ALPHA = 1.6732632423543772848170429916717
SELU_SCALE = 1.0507009873554804934193349852946


def _selu(x):
    # F.selu semantics; dtype follows x (bf16 on v6e/v7x, f32 on v5e).
    return SELU_SCALE * jnp.where(x > 0, x, SELU_ALPHA * (jnp.exp(x) - 1.0))


def _round_up(x, m):
    return ((x + m - 1) // m) * m


def _bf16_elementwise_ok():
    """True when bf16 VPU/EUP exist (v6e / v7x); v5e and older keep f32 SELU."""
    try:
        kind = jax.devices()[0].device_kind.lower()
    except Exception:
        return False
    if any(t in kind for t in ("v2", "v3", "v4", "v5")):
        return False
    return ("v6" in kind) or ("v7" in kind) or ("7x" in kind)


def _choose_tile_m(batch, target):
    """Row-tile size: big tiles (amortize ~0.35us/step), >=2 grid steps when the
    batch allows it (so "parallel" actually uses both v7x TensorCores), minimal
    padded rows, and 16-aligned (or == batch, which is always legal)."""
    if batch <= 16:
        return batch
    n_tiles = max(2, pl.cdiv(batch, target))
    tile = _round_up(pl.cdiv(batch, n_tiles), 16)
    if tile >= batch:
        return batch
    return tile


def _head_kernel(x_ref, w2_ref, b2_ref, w5_ref, b5_ref, o_ref, *, bf16_selu):
    # x_ref : [tile_m, H]   CLS (t=0) hidden-state rows, native dtype of l0 output
    # w2_ref: [H, T]  bf16 ; b2_ref: [1, T]  f32
    # w5_ref: [T, Lp] bf16 (eval-BN scale folded) ; b5_ref: [1, Lp] f32 (BN shift folded)
    # o_ref : [tile_m, Lp]  bf16, lane-dense (Lp = num_labels rounded up to 128)
    x = x_ref[...]
    if bf16_selu:
        # v6e/v7x: bf16 VPU+EUP; the MXU consumes bf16 anyway so matmul-input
        # precision is unchanged while VALU work / vreg pressure halves.
        x = _selu(x.astype(jnp.bfloat16))
    else:
        # v5e: no bf16 VPU/EUP -> SELU in f32, then narrow for the MXU.
        x = _selu(x.astype(jnp.float32)).astype(jnp.bfloat16)
    h = jnp.dot(x, w2_ref[...], preferred_element_type=jnp.float32)   # l2 GEMM, f32 acc
    h = _selu(h + b2_ref[...])                                        # selu(l2(.)), tiny [tile_m, T] in f32
    # BatchNorm1d (eval, channel t=0) is pre-folded into w5/b5 by prepare_head_params.
    o = jnp.dot(h.astype(w5_ref.dtype), w5_ref[...],
                preferred_element_type=jnp.float32)                   # l5 GEMM, f32 acc
    o_ref[...] = (o + b5_ref[...]).astype(o_ref.dtype)                # bf16 writeback (halves HBM out traffic)


def prepare_head_params(w2, b2, gamma, beta, run_mean, run_var, w5, b5, *,
                        eps=1e-5, compute_dtype=jnp.bfloat16):
    """One-time fold/pad/cast of the head weights (hoisted off the per-call path).

    Folds the eval-mode BatchNorm1d affine of channel 0 (the only surviving
    sequence position) into the l5 weights/bias:
        (h*s0 + t0) @ W5 + b5 == h @ (s0*W5) + (t0*colsum(W5) + b5)
    pads num_labels up to a lane-dense multiple of 128, and casts GEMM operands
    to bf16 (f32 accumulation happens inside the kernel).
    """
    T = w2.shape[1]
    L = w5.shape[1]
    L_pad = _round_up(L, 128)

    scale0 = gamma[0] / jnp.sqrt(run_var[0] + eps)
    shift0 = beta[0] - run_mean[0] * scale0
    w5_f = scale0 * w5.astype(jnp.float32)                                   # [T, L]
    b5_f = b5.astype(jnp.float32) + shift0 * jnp.sum(w5.astype(jnp.float32), axis=0)

    w5_p = jnp.zeros((T, L_pad), jnp.float32).at[:, :L].set(w5_f).astype(compute_dtype)
    b5_p = jnp.zeros((1, L_pad), jnp.float32).at[0, :L].set(b5_f)
    w2_c = w2.astype(compute_dtype)                                          # [H, T]
    b2_r = b2.reshape(1, T).astype(jnp.float32)
    return w2_c, b2_r, w5_p, b5_p


@functools.partial(
    jax.jit,
    static_argnames=("num_labels", "target_tile_m", "out_dtype", "bf16_selu"))
def _head_forward(hidden, w2_c, b2_r, w5_p, b5_p, *, num_labels, target_tile_m,
                  out_dtype, bf16_selu):
    B, T, H = hidden.shape
    L_pad = w5_p.shape[1]
    tile_m = _choose_tile_m(B, target_tile_m)
    grid_m = pl.cdiv(B, tile_m)

    # Feed the CLS (t=0) rows straight out of `hidden`: when H is a multiple of
    # 128 they are a rectangular (tile_m, H) window of the free (B, T*H) view,
    # so the kernel reads only 1/T of the hidden state with zero extra passes.
    if H % 128 == 0:
        x_in = hidden.reshape(B, T * H)
    else:
        # TODO(synk): strided in-kernel DMA gather for H % 128 != 0; under jit
        # this slice still fuses with the surrounding XLA ops.
        x_in = hidden[:, 0, :]
    x_spec = pl.BlockSpec((tile_m, H), lambda i: (i, 0))

    out = pl.pallas_call(
        functools.partial(_head_kernel, bf16_selu=bf16_selu),
        out_shape=jax.ShapeDtypeStruct((B, L_pad), out_dtype),
        grid_spec=pltpu.PrefetchScalarGridSpec(
            num_scalar_prefetch=0,
            grid=(grid_m,),
            in_specs=[
                x_spec,                                          # CLS rows (streamed)
                pl.BlockSpec((H, T), lambda i: (0, 0)),          # W2 (tiny, resident)
                pl.BlockSpec((1, T), lambda i: (0, 0)),          # b2
                pl.BlockSpec((T, L_pad), lambda i: (0, 0)),      # W5 (BN folded, lane padded)
                pl.BlockSpec((1, L_pad), lambda i: (0, 0)),      # b5 (BN folded, lane padded)
            ],
            out_specs=pl.BlockSpec((tile_m, L_pad), lambda i: (i, 0)),
        ),
        compiler_params=pltpu.CompilerParams(
            dimension_semantics=("parallel",),       # row tiles shard across TCs (v7x)
            vmem_limit_bytes=32 * 1024 * 1024,       # safe on v5e/v6e/v7x at tile_m<=4096
        ),
    )(x_in, w2_c, b2_r, w5_p, b5_p)

    return out[:, :num_labels]


def model_head_forward(hidden, head_params, *, num_labels, target_tile_m=2048,
                       out_dtype=jnp.bfloat16):
    """hidden: [B, T, H] last_hidden_state of l0; returns [B, num_labels] logits."""
    return _head_forward(hidden, *head_params, num_labels=num_labels,
                         target_tile_m=target_tile_m, out_dtype=out_dtype,
                         bf16_selu=_bf16_elementwise_ok())


def _reference(hidden, w2, b2, gamma, beta, run_mean, run_var, w5, b5, eps=1e-5):
    # Full f32 reference of the original module head (all B*T rows, then slice).
    x = _selu(hidden.astype(jnp.float32))                       # [B,T,H]
    x = _selu(jnp.einsum("bth,ho->bto", x, w2) + b2)            # [B,T,T]
    scale = gamma / jnp.sqrt(run_var + eps)
    shift = beta - run_mean * scale
    x = x * scale[None, :, None] + shift[None, :, None]         # BN over channel dim 1 (eval)
    x = jnp.einsum("bto,ol->btl", x, w5) + b5                   # [B,T,L]
    return x[:, 0, :]


if __name__ == "__main__":
    # Small shapes consistent with the module: output_length (hidden) H = 384
    # (module default), token_len (= seq len) T = 16, num_labels L = 4, batch B = 2.
    B, T, H, L = 2, 16, 384, 4

    key = jax.random.PRNGKey(0)
    ks = jax.random.split(key, 8)

    hidden = jax.random.normal(ks[0], (B, T, H), dtype=jnp.float32)  # stands in for l0 output
    w2 = jax.random.normal(ks[1], (H, T), dtype=jnp.float32) * 0.05  # Linear(H -> T), [in, out]
    b2 = jax.random.normal(ks[2], (T,), dtype=jnp.float32) * 0.05
    gamma = 1.0 + 0.1 * jax.random.normal(ks[3], (T,), dtype=jnp.float32)
    beta = 0.1 * jax.random.normal(ks[4], (T,), dtype=jnp.float32)
    run_mean = 0.1 * jax.random.normal(ks[5], (T,), dtype=jnp.float32)
    run_var = jnp.abs(1.0 + 0.1 * jax.random.normal(ks[6], (T,), dtype=jnp.float32))
    w5 = jax.random.normal(ks[7], (T, L), dtype=jnp.float32) * 0.05  # Linear(T -> L), [in, out]
    b5 = jnp.zeros((L,), dtype=jnp.float32)

    params = prepare_head_params(w2, b2, gamma, beta, run_mean, run_var, w5, b5)
    out = model_head_forward(hidden, params, num_labels=L)
    out = jax.block_until_ready(out)

    ref = _reference(hidden, w2, b2, gamma, beta, run_mean, run_var, w5, b5)
    assert out.shape == (B, L), out.shape
    # bf16 MXU inputs / bf16 output with f32 accumulation -> relaxed tolerance.
    assert jnp.allclose(out.astype(jnp.float32), ref, atol=3e-2, rtol=3e-2), (out, ref)

    print("KERNEL_OK")
</pallas_src>

<mosaic_0001>
module attributes {stable_mosaic.version = 11 : i64} {
  func.func @_head_kernel(%arg0: i32, %arg1: memref<2x384xf32, #tpu.memory_space<vmem>>, %arg2: memref<384x16xbf16, #tpu.memory_space<vmem>>, %arg3: memref<1x16xf32, #tpu.memory_space<vmem>>, %arg4: memref<16x128xbf16, #tpu.memory_space<vmem>>, %arg5: memref<1x128xf32, #tpu.memory_space<vmem>>, %arg6: memref<2x128xbf16, #tpu.memory_space<vmem>>) attributes {dimension_semantics = [#tpu.dimension_semantics<parallel>], iteration_bounds = array<i64: 1>, scalar_prefetch = 0 : i64, scratch_operands = 0 : i64, tpu.core_type = #tpu.core_type<tc>, window_params = [{transform_indices = @transform_0, window_bounds = array<i64: 2, 384>}, {pipeline_mode = #tpu.pipeline_mode<synchronous>, transform_indices = @transform_1, window_bounds = array<i64: 384, 16>}, {pipeline_mode = #tpu.pipeline_mode<synchronous>, transform_indices = @transform_2, window_bounds = array<i64: 1, 16>}, {pipeline_mode = #tpu.pipeline_mode<synchronous>, transform_indices = @transform_3, window_bounds = array<i64: 16, 128>}, {pipeline_mode = #tpu.pipeline_mode<synchronous>, transform_indices = @transform_4, window_bounds = array<i64: 1, 128>}, {transform_indices = @transform_5, window_bounds = array<i64: 2, 128>}]} {
    %c0 = arith.constant 0 : index
    %c0_0 = arith.constant 0 : index
    %0 = vector.load %arg1[%c0, %c0_0] : memref<2x384xf32, #tpu.memory_space<vmem>>, vector<2x384xf32>
    %cst = arith.constant 0.000000e+00 : f32
    %1 = vector.broadcast %cst : f32 to vector<2x384xf32>
    %2 = arith.cmpf ogt, %0, %1 : vector<2x384xf32>
    %3 = math.exp %0 : vector<2x384xf32>
    %cst_1 = arith.constant 1.000000e+00 : f32
    %4 = vector.broadcast %cst_1 : f32 to vector<2x384xf32>
    %5 = arith.subf %3, %4 : vector<2x384xf32>
    %cst_2 = arith.constant 1.67326319 : f32
    %6 = vector.broadcast %cst_2 : f32 to vector<2x384xf32>
    %7 = arith.mulf %6, %5 : vector<2x384xf32>
    %8 = arith.select %2, %0, %7 : vector<2x384xi1>, vector<2x384xf32>
    %cst_3 = arith.constant 1.05070102 : f32
    %9 = vector.broadcast %cst_3 : f32 to vector<2x384xf32>
    %10 = arith.mulf %9, %8 : vector<2x384xf32>
    %11 = arith.truncf %10 : vector<2x384xf32> to vector<2x384xbf16>
    %c0_4 = arith.constant 0 : index
    %c0_5 = arith.constant 0 : index
    %12 = vector.load %arg2[%c0_4, %c0_5] : memref<384x16xbf16, #tpu.memory_space<vmem>>, vector<384x16xbf16>
    %cst_6 = arith.constant dense<0.000000e+00> : vector<2x16xf32>
    %13 = tpu.matmul %11, %12, %cst_6 {dimension_numbers = #tpu.dot_dimension_numbers<[1], [0], [0], [1], [0, 0, 1, 1], [], []>} : vector<2x384xbf16>, vector<384x16xbf16>, vector<2x16xf32> -> vector<2x16xf32>
    %c0_7 = arith.constant 0 : index
    %c0_8 = arith.constant 0 : index
    %14 = vector.load %arg3[%c0_7, %c0_8] : memref<1x16xf32, #tpu.memory_space<vmem>>, vector<1x16xf32>
    %15 = vector.broadcast %14 : vector<1x16xf32> to vector<2x16xf32>
    %16 = arith.addf %13, %15 : vector<2x16xf32>
    %cst_9 = arith.constant 0.000000e+00 : f32
    %17 = vector.broadcast %cst_9 : f32 to vector<2x16xf32>
    %18 = arith.cmpf ogt, %16, %17 : vector<2x16xf32>
    %19 = math.exp %16 : vector<2x16xf32>
    %cst_10 = arith.constant 1.000000e+00 : f32
    %20 = vector.broadcast %cst_10 : f32 to vector<2x16xf32>
    %21 = arith.subf %19, %20 : vector<2x16xf32>
    %cst_11 = arith.constant 1.67326319 : f32
    %22 = vector.broadcast %cst_11 : f32 to vector<2x16xf32>
    %23 = arith.mulf %22, %21 : vector<2x16xf32>
    %24 = arith.select %18, %16, %23 : vector<2x16xi1>, vector<2x16xf32>
    %cst_12 = arith.constant 1.05070102 : f32
    %25 = vector.broadcast %cst_12 : f32 to vector<2x16xf32>
    %26 = arith.mulf %25, %24 : vector<2x16xf32>
    %27 = arith.truncf %26 : vector<2x16xf32> to vector<2x16xbf16>
    %c0_13 = arith.constant 0 : index
    %c0_14 = arith.constant 0 : index
    %28 = vector.load %arg4[%c0_13, %c0_14] : memref<16x128xbf16, #tpu.memory_space<vmem>>, vector<16x128xbf16>
    %cst_15 = arith.constant dense<0.000000e+00> : vector<2x128xf32>
    %29 = tpu.matmul %27, %28, %cst_15 {dimension_numbers = #tpu.dot_dimension_numbers<[1], [0], [0], [1], [0, 0, 1, 1], [], []>} : vector<2x16xbf16>, vector<16x128xbf16>, vector<2x128xf32> -> vector<2x128xf32>
    %c0_16 = arith.constant 0 : index
    %c0_17 = arith.constant 0 : index
    %30 = vector.load %arg5[%c0_16, %c0_17] : memref<1x128xf32, #tpu.memory_space<vmem>>, vector<1x128xf32>
    %31 = vector.broadcast %30 : vector<1x128xf32> to vector<2x128xf32>
    %32 = arith.addf %29, %31 : vector<2x128xf32>
    %33 = arith.truncf %32 : vector<2x128xf32> to vector<2x128xbf16>
    %c0_18 = arith.constant 0 : index
    %c0_19 = arith.constant 0 : index
    %34 = vector.load %arg6[%c0_18, %c0_19] : memref<2x128xbf16, #tpu.memory_space<vmem>>, vector<2x128xbf16>
    tpu.vector_store %arg6[%c0_18, %c0_19], %33 {strides = array<i32>} : memref<2x128xbf16, #tpu.memory_space<vmem>>, vector<2x128xbf16>,
    return
  }
  func.func @transform_0(%arg0: i32) -> (i32, i32) {
    %c0_i32 = arith.constant 0 : i32
    %c0_i32_0 = arith.constant 0 : i32
    return %arg0, %c0_i32 : i32, i32
  }
  func.func @transform_1(%arg0: i32) -> (i32, i32) {
    %c0_i32 = arith.constant 0 : i32
    %c0_i32_0 = arith.constant 0 : i32
    %c0_i32_1 = arith.constant 0 : i32
    return %c0_i32, %c0_i32_0 : i32, i32
  }
  func.func @transform_2(%arg0: i32) -> (i32, i32) {
    %c0_i32 = arith.constant 0 : i32
    %c0_i32_0 = arith.constant 0 : i32
    %c0_i32_1 = arith.constant 0 : i32
    return %c0_i32, %c0_i32_0 : i32, i32
  }
  func.func @transform_3(%arg0: i32) -> (i32, i32) {
    %c0_i32 = arith.constant 0 : i32
    %c0_i32_0 = arith.constant 0 : i32
    %c0_i32_1 = arith.constant 0 : i32
    return %c0_i32, %c0_i32_0 : i32, i32
  }
  func.func @transform_4(%arg0: i32) -> (i32, i32) {
    %c0_i32 = arith.constant 0 : i32
    %c0_i32_0 = arith.constant 0 : i32
    %c0_i32_1 = arith.constant 0 : i32
    return %c0_i32, %c0_i32_0 : i32, i32
  }
  func.func @transform_5(%arg0: i32) -> (i32, i32) {
    %c0_i32 = arith.constant 0 : i32
    %c0_i32_0 = arith.constant 0 : i32
    return %arg0, %c0_i32 : i32, i32
  }
}

</mosaic_0001>

<llo_original>
// kernel: _head_forward.1
$region0: #{_head_forward.1}
  #allocation0 [shape = 'u32[]', space=smem, size = 0x4, offset = 0x4, fixed_abs, tag = 'smem constant byte address 0x4 - core index']
  #allocation1 [shape = 'u32[144,128]{1,0:T(1,128)}', space=vmem, size = 0x12000, scoped, tag = 'internal scratch']
  %s0 = inlined_call_operand.vmem [shape: f32[2,6144], index: 0, kind: input, shape index: {}]
  %s1 = inlined_call_operand.vmem [shape: bf16[384,16], index: 1, kind: input, shape index: {}]
  %s2 = inlined_call_operand.vmem [shape: f32[1,16], index: 2, kind: input, shape index: {}]
  %s3 = inlined_call_operand.vmem [shape: bf16[16,128], index: 3, kind: input, shape index: {}]
  %s4 = inlined_call_operand.vmem [shape: f32[1,128], index: 4, kind: input, shape index: {}]
  %s5 = inlined_call_operand.hbm [shape: bf16[2,128], index: 5, kind: output, shape index: {}]
  %s6 = sld [smem:[#allocation0]]
  $region30: #{_head_forward.1} parent=0
    _
  %s8 = ssub.s32 1, %s6
  %s9 = scalar_select 0, %s8, %s6
  $region1: #{_head_forward.1} parent=0
    #allocation2 [shape = 'u8[512]{0}', space=vmem, size = 0x400, scoped, tag = 'output window, operand 0, single buffered']
    #allocation3 [shape = 's32[1]{0}', space=sflag, size = 0x4, scoped, tag = 'scoped memory for _head_forward.1']
    %10 = vsyncpa [#allocation3], 0
    // Predicated region
    $region2: #{_head_forward.1} parent=1 // pred_check
      _
    $region3: #{_head_forward.1} parent=1 // pred_check_branch
      %12 = sbr.rel (0) target = $region5
    $region4: #{_head_forward.1} parent=1 // pred_region
      _
    $region5: #{_head_forward.1} parent=1 // pred_fallthru
      _
    // Predicated region
    $region6: #{_head_forward.1} parent=1 // pred_check
      _
    $region7: #{_head_forward.1} parent=1 // pred_check_branch
      %14 = sbr.rel (0) target = $region9
    $region8: #{_head_forward.1} parent=1 // pred_region
      _
    $region9: #{_head_forward.1} parent=1 // pred_fallthru
      _
    // Predicated region
    $region10: #{_head_forward.1} parent=1 // pred_check
      _
    $region11: #{_head_forward.1} parent=1 // pred_check_branch
      %16 = sbr.rel (0) target = $region13
    $region12: #{_head_forward.1} parent=1 // pred_region
      _
    $region13: #{_head_forward.1} parent=1 // pred_fallthru
      _
    // Predicated region
    $region14: #{_head_forward.1} parent=1 // pred_check
      _
    $region15: #{_head_forward.1} parent=1 // pred_check_branch
      %18 = sbr.rel (0) target = $region17
    $region16: #{_head_forward.1} parent=1 // pred_region
      _
    $region17: #{_head_forward.1} parent=1 // pred_fallthru
      _
    // Predicated region
    $region18: #{_head_forward.1} parent=1 // pred_check
      _
    $region19: #{_head_forward.1} parent=1 // pred_check_branch
      %20 = sbr.rel (0) target = $region21
    $region20: #{_head_forward.1} parent=1 // pred_region
      _
    $region21: #{_head_forward.1} parent=1 // pred_fallthru
      _
    %v22 = vld [vmem:[%s0] sm:$0x3f]
    %vm23 = vcmp.gt.f32.partialorder %v22, 0.0
    %v24 = vmul.f32 %v22, 1.442695
    %v25 = vpow.pop %v24
    %v26 = vsub.f32 %v25, 1.0
    %v27 = vmul.f32 %v26, 1.6732632
    %v28 = vsel %vm23, %v22, %v27
    %v29 = vmul.f32 %v28, 1.050701
    %v31 = vcombine.high %v29, %v29
    %v33 = vunpack.c.l.s4 1983009808
    %v34 = vunpack.c.0.s8 %v33
    %v35 = vlaneseq
    %v36 = vshrl.u32 %v35, 7
    %v37 = vsub.s32 %v34, %v36
    %v38 = vrot.slane %v29, %v37
    %v40 = vunpack.c.l.s4 1983009808
    %v41 = vunpack.c.0.s8 %v40
    %v42 = vlaneseq
    %v43 = vshrl.u32 %v42, 7
    %v44 = vsub.s32 %v41, %v43
    %v45 = vrot.slane %v31, %v44
    %v46 = vcombine.high %v38, %v38
    %v50 = vpack.c.bf16 %v38, %v38
    %v51 = vpack.c.bf16 %v46, %v46
    %v52 = vpack.c.bf16 %v45, %v45
    %v53 = vld [vmem:[%s1] sm:$0xf]
    %v54 = vld [vmem:[%s1 + $0x4] sm:$0xf]
    %v55 = vld [vmem:[%s1 + $0x8] sm:$0xf]
    %v56 = vld [vmem:[%s1 + $0xc] sm:$0xf]
    %v57 = vld [vmem:[%s1 + $0x10] sm:$0xf]
    %v58 = vld [vmem:[%s1 + $0x14] sm:$0xf]
    %v59 = vld [vmem:[%s1 + $0x18] sm:$0xf]
    %v60 = vld [vmem:[%s1 + $0x1c] sm:$0xf]
    %v61 = vld [vmem:[%s1 + $0x20] sm:$0xf]
    %v62 = vld [vmem:[%s1 + $0x24] sm:$0xf]
    %v63 = vld [vmem:[%s1 + $0x28] sm:$0xf]
    %v64 = vld [vmem:[%s1 + $0x2c] sm:$0xf]
    %v65 = vld [vmem:[%s1 + $0x30] sm:$0xf]
    %v66 = vld [vmem:[%s1 + $0x34] sm:$0xf]
    %v67 = vld [vmem:[%s1 + $0x38] sm:$0xf]
    %v68 = vld [vmem:[%s1 + $0x3c] sm:$0xf]
    %v69 = vld [vmem:[%s1 + $0x40] sm:$0xf]
    %v70 = vld [vmem:[%s1 + $0x44] sm:$0xf]
    %v71 = vld [vmem:[%s1 + $0x48] sm:$0xf]
    %v72 = vld [vmem:[%s1 + $0x4c] sm:$0xf]
    %v73 = vld [vmem:[%s1 + $0x50] sm:$0xf]
    %v74 = vld [vmem:[%s1 + $0x54] sm:$0xf]
    %v75 = vld [vmem:[%s1 + $0x58] sm:$0xf]
    %v76 = vld [vmem:[%s1 + $0x5c] sm:$0xf]
    %v77 = vld [vmem:[%s1 + $0x60] sm:$0xf]
    %v78 = vld [vmem:[%s1 + $0x64] sm:$0xf]
    %v79 = vld [vmem:[%s1 + $0x68] sm:$0xf]
    %v80 = vld [vmem:[%s1 + $0x6c] sm:$0xf]
    %v81 = vld [vmem:[%s1 + $0x70] sm:$0xf]
    %v82 = vld [vmem:[%s1 + $0x74] sm:$0xf]
    %v83 = vld [vmem:[%s1 + $0x78] sm:$0xf]
    %v84 = vld [vmem:[%s1 + $0x7c] sm:$0xf]
    %v85 = vld [vmem:[%s1 + $0x80] sm:$0xf]
    %v86 = vld [vmem:[%s1 + $0x84] sm:$0xf]
    %v87 = vld [vmem:[%s1 + $0x88] sm:$0xf]
    %v88 = vld [vmem:[%s1 + $0x8c] sm:$0xf]
    %v89 = vld [vmem:[%s1 + $0x90] sm:$0xf]
    %v90 = vld [vmem:[%s1 + $0x94] sm:$0xf]
    %v91 = vld [vmem:[%s1 + $0x98] sm:$0xf]
    %v92 = vld [vmem:[%s1 + $0x9c] sm:$0xf]
    %v93 = vld [vmem:[%s1 + $0xa0] sm:$0xf]
    %v94 = vld [vmem:[%s1 + $0xa4] sm:$0xf]
    %v95 = vld [vmem:[%s1 + $0xa8] sm:$0xf]
    %v96 = vld [vmem:[%s1 + $0xac] sm:$0xf]
    %v97 = vld [vmem:[%s1 + $0xb0] sm:$0xf]
    %v98 = vld [vmem:[%s1 + $0xb4] sm:$0xf]
    %v99 = vld [vmem:[%s1 + $0xb8] sm:$0xf]
    %v100 = vld [vmem:[%s1 + $0xbc] sm:$0xf]
    %v101 = vld [vmem:[%s2] sm:$0x1]
    %v103 = vlaneseq
    %v104 = vshrl.u32 %v103, 7
    %v105 = vsub.s32 0, %v104
    %v106 = vrot.slane %v101, %v105
    %v156 = vunpack.c.l.b16 %v53
    %v157 = vunpack.c.l.b16 %v54
    %v158 = vunpack.c.l.b16 %v55
    %v159 = vunpack.c.l.b16 %v56
    %v160 = vunpack.c.l.b16 %v57
    %v161 = vunpack.c.l.b16 %v58
    %v162 = vunpack.c.l.b16 %v59
    %v163 = vunpack.c.l.b16 %v60
    %v164 = vunpack.c.l.b16 %v61
    %v165 = vunpack.c.l.b16 %v62
    %v166 = vunpack.c.l.b16 %v63
    %v167 = vunpack.c.l.b16 %v64
    %v168 = vunpack.c.l.b16 %v65
    %v169 = vunpack.c.l.b16 %v66
    %v170 = vunpack.c.l.b16 %v67
    %v171 = vunpack.c.l.b16 %v68
    %v172 = vunpack.c.l.b16 %v69
    %v173 = vunpack.c.l.b16 %v70
    %v174 = vunpack.c.l.b16 %v71
    %v175 = vunpack.c.l.b16 %v72
    %v176 = vunpack.c.l.b16 %v73
    %v177 = vunpack.c.l.b16 %v74
    %v178 = vunpack.c.l.b16 %v75
    %v179 = vunpack.c.l.b16 %v76
    %v180 = vunpack.c.l.b16 %v77
    %v181 = vunpack.c.l.b16 %v78
    %v182 = vunpack.c.l.b16 %v79
    %v183 = vunpack.c.l.b16 %v80
    %v184 = vunpack.c.l.b16 %v81
    %v185 = vunpack.c.l.b16 %v82
    %v186 = vunpack.c.l.b16 %v83
    %v187 = vunpack.c.l.b16 %v84
    %v188 = vunpack.c.l.b16 %v85
    %v189 = vunpack.c.l.b16 %v86
    %v190 = vunpack.c.l.b16 %v87
    %v191 = vunpack.c.l.b16 %v88
    %v192 = vunpack.c.l.b16 %v89
    %v193 = vunpack.c.l.b16 %v90
    %v194 = vunpack.c.l.b16 %v91
    %v195 = vunpack.c.l.b16 %v92
    %v196 = vunpack.c.l.b16 %v93
    %v197 = vunpack.c.l.b16 %v94
    %v198 = vunpack.c.l.b16 %v95
    %v199 = vunpack.c.l.b16 %v96
    %v200 = vunpack.c.l.b16 %v97
    %v201 = vunpack.c.l.b16 %v98
    %v202 = vunpack.c.l.b16 %v99
    %v203 = vunpack.c.l.b16 %v100
    %v204 = vpack.c.b16 %v157, %v156
    %v205 = vpack.c.b16 %v159, %v158
    %v206 = vpack.c.b16 %v161, %v160
    %v207 = vpack.c.b16 %v163, %v162
    %v208 = vpack.c.b16 %v165, %v164
    %v209 = vpack.c.b16 %v167, %v166
    %v210 = vpack.c.b16 %v169, %v168
    %v211 = vpack.c.b16 %v171, %v170
    %v212 = vpack.c.b16 %v173, %v172
    %v213 = vpack.c.b16 %v175, %v174
    %v214 = vpack.c.b16 %v177, %v176
    %v215 = vpack.c.b16 %v179, %v178
    %v216 = vpack.c.b16 %v181, %v180
    %v217 = vpack.c.b16 %v183, %v182
    %v218 = vpack.c.b16 %v185, %v184
    %v219 = vpack.c.b16 %v187, %v186
    %v220 = vpack.c.b16 %v189, %v188
    %v221 = vpack.c.b16 %v191, %v190
    %v222 = vpack.c.b16 %v193, %v192
    %v223 = vpack.c.b16 %v195, %v194
    %v224 = vpack.c.b16 %v197, %v196
    %v225 = vpack.c.b16 %v199, %v198
    %v226 = vpack.c.b16 %v201, %v200
    %v227 = vpack.c.b16 %v203, %v202
    %252 = vmatprep.subr.bf16.mxu0 0
    %253 = vmatpush1.bf16.msra.mxu0 %v204
    %254 = vmatprep.subr.bf16.mxu0 0
    %255 = vmatpush1.bf16.msra.mxu0 %v205
    %256 = vmatprep.subr.bf16.mxu0 0
    %257 = vmatpush1.bf16.msra.mxu0 %v206
    %258 = vmatprep.subr.bf16.mxu0 0
    %259 = vmatpush1.bf16.msra.mxu0 %v207
    %260 = vmatprep.subr.bf16.mxu0 0
    %261 = vmatpush1.bf16.msra.mxu0 %v208
    %262 = vmatprep.subr.bf16.mxu0 0
    %263 = vmatpush1.bf16.msra.mxu0 %v209
    %264 = vmatprep.subr.bf16.mxu0 0
    %265 = vmatpush1.bf16.msra.mxu0 %v210
    %266 = vmatprep.subr.bf16.mxu0 0
    %267 = vmatpush1.bf16.msra.mxu0 %v211
    %268 = vmatprep.subr.bf16.mxu0 0
    %269 = vmatpush1.bf16.msra.mxu0 %v212
    %270 = vmatprep.subr.bf16.mxu0 0
    %271 = vmatpush1.bf16.msra.mxu0 %v213
    %272 = vmatprep.subr.bf16.mxu0 0
    %273 = vmatpush1.bf16.msra.mxu0 %v214
    %274 = vmatprep.subr.bf16.mxu0 0
    %275 = vmatpush1.bf16.msra.mxu0 %v215
    %276 = vmatprep.subr.bf16.mxu0 0
    %277 = vmatpush1.bf16.msra.mxu0 %v216
    %278 = vmatprep.subr.bf16.mxu0 0
    %279 = vmatpush1.bf16.msra.mxu0 %v217
    %280 = vmatprep.subr.bf16.mxu0 0
    %281 = vmatpush1.bf16.msra.mxu0 %v218
    %282 = vmatprep.subr.bf16.mxu0 0
    %283 = vmatpush1.bf16.msra.mxu0 %v219
    %284 = vmatprep.mubr.bf16.mxu0 %v51
    %285 = vmatmul.mubr.bf16.gmra.mrb[0].mxu0 %v50
    %v286 = vpop.f32.mrb[0].mxu0
    %v287 = vadd.f32 %v106, %v286
    %v288 = vpop.f32.mrb[0].mxu0
    %v289 = vpop.f32.mrb[0].mxu0
    %v290 = vpop.f32.mrb[0].mxu0
    %291 = vdwg.mxu0
    %292 = vmatprep.subr.bf16.mxu0 0
    %293 = vmatpush1.bf16.msra.mxu0 %v220
    %294 = vmatprep.subr.bf16.mxu0 0
    %295 = vmatpush1.bf16.msra.mxu0 %v221
    %296 = vmatprep.subr.bf16.mxu0 0
    %297 = vmatpush1.bf16.msra.mxu0 %v222
    %298 = vmatprep.subr.bf16.mxu0 0
    %299 = vmatpush1.bf16.msra.mxu0 %v223
    %300 = vmatprep.subr.bf16.mxu0 0
    %301 = vmatpush1.bf16.msra.mxu0 %v224
    %302 = vmatprep.subr.bf16.mxu0 0
    %303 = vmatpush1.bf16.msra.mxu0 %v225
    %304 = vmatprep.subr.bf16.mxu0 0
    %305 = vmatpush1.bf16.msra.mxu0 %v226
    %306 = vmatprep.subr.bf16.mxu0 0
    %307 = vmatpush1.bf16.msra.mxu0 %v227
    %308 = vmatprep.subr.bf16.mxu0 0
    %309 = vmatpush1.bf16.msra.mxu0 0
    %310 = vmatprep.subr.bf16.mxu0 0
    %311 = vmatpush1.bf16.msra.mxu0 0
    %312 = vmatprep.subr.bf16.mxu0 0
    %313 = vmatpush1.bf16.msra.mxu0 0
    %314 = vmatprep.subr.bf16.mxu0 0
    %315 = vmatpush1.bf16.msra.mxu0 0
    %316 = vmatprep.subr.bf16.mxu0 0
    %317 = vmatpush1.bf16.msra.mxu0 0
    %318 = vmatprep.subr.bf16.mxu0 0
    %319 = vmatpush1.bf16.msra.mxu0 0
    %320 = vmatprep.subr.bf16.mxu0 0
    %321 = vmatpush1.bf16.msra.mxu0 0
    %322 = vmatprep.subr.bf16.mxu0 0
    %323 = vmatpush1.bf16.msra.mxu0 0
    %324 = vmatprep.mubr.bf16.mxu0 0
    %325 = vmatmul.mubr.bf16.gmra.mrb[0].mxu0 %v52
    %v326 = vpop.f32.mrb[0].mxu0
    %v327 = vadd.f32 %v287, %v326
    %v328 = vpop.f32.mrb[0].mxu0
    %v329 = vpop.f32.mrb[0].mxu0
    %v330 = vpop.f32.mrb[0].mxu0
    %331 = vdwg.mxu0
    %vm332 = vcmp.gt.f32.partialorder %v327, 0.0
    %v333 = vmul.f32 %v327, 1.442695
    %v334 = vpow.pop %v333
    %v335 = vsub.f32 %v334, 1.0
    %v336 = vmul.f32 %v335, 1.6732632
    %v337 = vsel %vm332, %v327, %v336
    %v338 = vmul.f32 %v337, 1.050701
    %v339 = vpack.c.bf16 %v338, %v338
    %v340 = vld [vmem:[%s3] sm:$0xf]
    %v341 = vld [vmem:[%s3 + $0x4] sm:$0xf]
    %v342 = vld [vmem:[%s4] sm:$0x1]
    %v344 = vlaneseq
    %v345 = vshrl.u32 %v344, 7
    %v346 = vsub.s32 0, %v345
    %v347 = vrot.slane %v342, %v346
    %v351 = vunpack.c.l.b16 %v340
    %v352 = vunpack.c.l.b16 %v341
    %v353 = vpack.c.b16 %v352, %v351
    %vm355 = vcmask 130048
    %v357 = vsel %vm355, %v339, 0
    %359 = vmatprep.subr.bf16.mxu0 0
    %360 = vmatpush1.bf16.msra.mxu0 %v353
    %361 = vmatprep.subr.bf16.mxu0 0
    %362 = vmatpush1.bf16.msra.mxu0 0
    %363 = vmatprep.subr.bf16.mxu0 0
    %364 = vmatpush1.bf16.msra.mxu0 0
    %365 = vmatprep.subr.bf16.mxu0 0
    %366 = vmatpush1.bf16.msra.mxu0 0
    %367 = vmatprep.subr.bf16.mxu0 0
    %368 = vmatpush1.bf16.msra.mxu0 0
    %369 = vmatprep.subr.bf16.mxu0 0
    %370 = vmatpush1.bf16.msra.mxu0 0
    %371 = vmatprep.subr.bf16.mxu0 0
    %372 = vmatpush1.bf16.msra.mxu0 0
    %373 = vmatprep.subr.bf16.mxu0 0
    %374 = vmatpush1.bf16.msra.mxu0 0
    %375 = vmatprep.subr.bf16.mxu0 0
    %376 = vmatpush1.bf16.msra.mxu0 0
    %377 = vmatprep.subr.bf16.mxu0 0
    %378 = vmatpush1.bf16.msra.mxu0 0
    %379 = vmatprep.subr.bf16.mxu0 0
    %380 = vmatpush1.bf16.msra.mxu0 0
    %381 = vmatprep.subr.bf16.mxu0 0
    %382 = vmatpush1.bf16.msra.mxu0 0
    %383 = vmatprep.subr.bf16.mxu0 0
    %384 = vmatpush1.bf16.msra.mxu0 0
    %385 = vmatprep.subr.bf16.mxu0 0
    %386 = vmatpush1.bf16.msra.mxu0 0
    %387 = vmatprep.subr.bf16.mxu0 0
    %388 = vmatpush1.bf16.msra.mxu0 0
    %389 = vmatprep.subr.bf16.mxu0 0
    %390 = vmatpush1.bf16.msra.mxu0 0
    %391 = vmatprep.mubr.bf16.mxu0 0
    %392 = vmatmul.mubr.bf16.gmra.mrb[0].mxu0 %v357
    %v393 = vpop.f32.mrb[0].mxu0
    %v394 = vadd.f32 %v347, %v393
    %v395 = vpop.f32.mrb[0].mxu0
    %v396 = vpop.f32.mrb[0].mxu0
    %v397 = vpop.f32.mrb[0].mxu0
    %398 = vdwg.mxu0
    %v399 = vpack.c.bf16 %v394, %v394
    %400 = vst [vmem:[#allocation2] sm:$0x1] %v399
    // Predicated region
    $region22: #{_head_forward.1} parent=1 // pred_check
      _
    $region23: #{_head_forward.1} parent=1 // pred_check_branch
      %402 = sbr.rel (0) target = $region25
    $region24: #{_head_forward.1} parent=1 // pred_region
      %s404 = ssub.s32 16, 16
      %405 = vsyncadd [#allocation3], %s404
      %s407 = sshll.u32 [#allocation2], 4
      %s408 = int_to_ptr.vmem [resolvable:$true] %s407
      %410 = dma.vmem_to_hbm [thread:$0]  %s408, 16, %s5, [#allocation3]
    $region25: #{_head_forward.1} parent=1 // pred_fallthru
      _
    // Predicated region
    $region26: #{_head_forward.1} parent=1 // pred_check
      _
    $region27: #{_head_forward.1} parent=1 // pred_check_branch
      %412 = sbr.rel (0) target = $region29
    $region28: #{_head_forward.1} parent=1 // pred_region
      %413 = dma.done [#allocation3], 16
    $region29: #{_head_forward.1} parent=1 // pred_fallthru
      _
    %414 = vsyncpa [#allocation3], 1

</llo_original>
